<compile_context>
chip_gen: v6e
topology: v6e:2x2x1
jax: 0.10.0
libtpu: 0.0.40
codegen_flags: <defaults>
</compile_context>

<pallas_src>
import functools
import math

import jax
import jax.numpy as jnp
from jax.experimental import pallas as pl
from jax.experimental.pallas import tpu as pltpu


_ACT_VMEM_BUDGET = 24 << 20   # double-buffered activation blocks (x, o, [h])
_VMEM_LIMIT_BYTES = 32 << 20  # explicit scoped-VMEM limit (fits v5e/v6e/v7x)
_TM_FLOOR_ROWS = 32768        # target logical rows per grid step


def _round_up(x, m):
    return (x + m - 1) // m * m


def _default_pack_width():
    """Hidden-layer packed width: 256 on the 256x256-MXU chips, else 128."""
    try:
        kind = jax.devices()[0].device_kind.lower()
    except Exception:
        return 256
    for old in ("v2", "v3", "v4", "v5"):
        if old in kind:
            return 128
    return 256


def _mlp_kernel(x_ref, w0_ref, b0_ref, w1_ref, b1_ref, wo_ref, bo_ref,
                *out_refs, return_h, act_dtype):
    """One row-tile of the BasicDecoder MLP (all matmuls on the MXU).

    All tiles are in the packed layout (P logical rows per physical row,
    block-diagonal weights), so every vreg touched is lane-dense.  MXU
    operands are act_dtype (bf16 by default); accumulation, bias add and
    ReLU stay in f32.
    """
    x = x_ref[...]
    # layer 0: (tm/P, P*Din) @ (P*Din, P*H) -> f32, + bias, ReLU
    h = jnp.dot(x, w0_ref[...], preferred_element_type=jnp.float32)
    h = jnp.maximum(h + b0_ref[...], 0.0)
    # layer 1: (tm/P, P*H) @ (P*H, P*H) -> f32, + bias, ReLU
    h = jnp.dot(h.astype(act_dtype), w1_ref[...],
                preferred_element_type=jnp.float32)
    h = jnp.maximum(h + b1_ref[...], 0.0)
    # output layer: (tm/P, P*H) @ (P*H, P*Dout), no activation
    o = jnp.dot(h.astype(act_dtype), wo_ref[...],
                preferred_element_type=jnp.float32) + bo_ref[...]
    out_refs[0][...] = o.astype(out_refs[0].dtype)
    if return_h:
        out_refs[1][...] = h.astype(out_refs[1].dtype)


@functools.partial(
    jax.jit, static_argnames=("tm", "return_h", "act_dtype", "pack_width"))
def basic_decoder_forward(x, params, *, tm=None, return_h=False,
                          act_dtype=None, pack_width=None):
    """Run the BasicDecoder MLP.

    Args:
        x: [batch, ..., input_dim] array.
        params: dict with w0 [Din,H], b0 [1,H], w1 [H,H], b1 [1,H],
                wout [H,Dout], bout [1,Dout] (weights pre-transposed for
                x @ W, f32).
        tm: optional explicit logical row-tile size; None -> auto-picked from
            a target step count under a VMEM budget.
        return_h: if True also return the last hidden layer (extra HBM write).
        act_dtype: MXU-operand / HBM-storage dtype for activations & weights.
            Defaults to bf16 (the kernel is HBM-bound; f32 accumulation keeps
            error bounded).  Pass jnp.float32 for the bit-accurate path.
        pack_width: packed hidden lane width (256 fills the 256x256 MXU on
            v6e/v7x, 128 on v5e).  None -> auto-detect from the device kind.

    Returns:
        out [batch, ..., output_dim] in x.dtype
        (and h [batch, ..., hidden_dim] if return_h=True).
    """
    w0, b0 = params["w0"], params["b0"]
    w1, b1 = params["w1"], params["b1"]
    wo, bo = params["wout"], params["bout"]

    din, hid = w0.shape
    dout = wo.shape[1]

    act_dtype = jnp.dtype(jnp.bfloat16 if act_dtype is None else act_dtype)
    if pack_width is None:
        pack_width = _default_pack_width()

    lead = x.shape[:-1]
    n = math.prod(lead)
    x2 = x.reshape(n, din).astype(act_dtype)

    # ---- lane-dense packing: P logical rows per physical row --------------
    P = max(1, pack_width // hid)                # hid=32 -> P=8 (v6e/v7x) / 4
    isz = act_dtype.itemsize
    sub = 8 * (4 // isz)                         # sublane quantum (f32:8, bf16:16)
    row_align = P * sub

    # ---- row-tile selection: target step count, bounded pad waste ---------
    if tm is None:
        steps = max(1, -(-n // _TM_FLOOR_ROWS))
        if n >= 2 * row_align:
            steps = max(steps, 2)                # let both v7x TCs get work
        tm = _round_up(-(-n // steps), row_align)
    else:
        tm = _round_up(max(tm, row_align), row_align)

    # ---- VMEM budget (accounts for lane padding of narrow x/o blocks) -----
    per_packed_row = (_round_up(P * din, 128) * isz
                      + _round_up(P * dout, 128) * isz)
    if return_h:
        per_packed_row += _round_up(P * hid, 128) * isz
    tmp_max = max(sub, _ACT_VMEM_BUDGET // (2 * per_packed_row))
    tm_max = max(row_align, (tmp_max * P) // row_align * row_align)
    tm = min(tm, tm_max)

    n_pad = _round_up(n, tm)                     # ragged N: pad, slice later
    if n_pad != n:
        x2 = jnp.pad(x2, ((0, n_pad - n), (0, 0)))

    xp = x2.reshape(n_pad // P, P * din)         # free row-major reshape

    eye = jnp.eye(P, dtype=jnp.float32)
    w0p = jnp.kron(eye, w0).astype(act_dtype)    # (P*Din, P*H) block-diagonal
    w1p = jnp.kron(eye, w1).astype(act_dtype)    # (P*H,   P*H)
    wop = jnp.kron(eye, wo).astype(act_dtype)    # (P*H,   P*Dout)
    b0p = jnp.tile(b0.astype(jnp.float32), (1, P))   # (1, P*H)
    b1p = jnp.tile(b1.astype(jnp.float32), (1, P))   # (1, P*H)
    bop = jnp.tile(bo.astype(jnp.float32), (1, P))   # (1, P*Dout)

    tmp = tm // P
    grid = (n_pad // tm,)
    rows = lambda i: (i, 0)       # activations: tile over packed rows
    full = lambda i: (0, 0)       # weights/biases: same block every step

    in_specs = [
        pl.BlockSpec((tmp, P * din), rows),
        pl.BlockSpec((P * din, P * hid), full),
        pl.BlockSpec((1, P * hid), full),
        pl.BlockSpec((P * hid, P * hid), full),
        pl.BlockSpec((1, P * hid), full),
        pl.BlockSpec((P * hid, P * dout), full),
        pl.BlockSpec((1, P * dout), full),
    ]
    out_shapes = [jax.ShapeDtypeStruct((n_pad // P, P * dout), act_dtype)]
    out_specs = [pl.BlockSpec((tmp, P * dout), rows)]
    if return_h:
        out_shapes.append(jax.ShapeDtypeStruct((n_pad // P, P * hid), act_dtype))
        out_specs.append(pl.BlockSpec((tmp, P * hid), rows))

    flops = 2 * n_pad * P * (din * hid + hid * hid + hid * dout)
    bytes_acc = (
        n_pad * din * isz
        + sum(math.prod(s.shape) * jnp.dtype(s.dtype).itemsize for s in out_shapes)
        + (w0p.size + w1p.size + wop.size) * isz
        + (b0p.size + b1p.size + bop.size) * 4
    )

    results = pl.pallas_call(
        functools.partial(_mlp_kernel, return_h=return_h, act_dtype=act_dtype),
        out_shape=tuple(out_shapes),
        grid_spec=pltpu.PrefetchScalarGridSpec(
            num_scalar_prefetch=0,
            grid=grid,
            in_specs=in_specs,
            out_specs=out_specs,
        ),
        compiler_params=pltpu.CompilerParams(
            dimension_semantics=("parallel",),
            vmem_limit_bytes=_VMEM_LIMIT_BYTES),
        cost_estimate=pl.CostEstimate(
            flops=flops, transcendentals=0, bytes_accessed=bytes_acc),
    )(xp, w0p, b0p, w1p, b1p, wop, bop)

    out = results[0].reshape(n_pad, dout)[:n].astype(x.dtype).reshape(*lead, dout)
    if return_h:
        h = results[1].reshape(n_pad, hid)[:n].astype(x.dtype).reshape(*lead, hid)
        return out, h
    return out


def init_params(key, input_dim, hidden_dim, output_dim):
    """Deterministic synthetic parameter init (PyTorch layout then transposed)."""
    ks = jax.random.split(key, 6)

    def linear(kw, kb, fan_in, fan_out):
        # mimic nn.Linear's uniform(-1/sqrt(fan_in), 1/sqrt(fan_in)) init
        bound = 1.0 / jnp.sqrt(jnp.float32(fan_in))
        w = jax.random.uniform(kw, (fan_out, fan_in), jnp.float32, -bound, bound)
        b = jax.random.uniform(kb, (fan_out,), jnp.float32, -bound, bound)
        return w.T, b.reshape(1, fan_out)   # pre-transpose for x @ W

    w0, b0 = linear(ks[0], ks[1], input_dim, hidden_dim)
    w1, b1 = linear(ks[2], ks[3], hidden_dim, hidden_dim)
    wo, bo = linear(ks[4], ks[5], hidden_dim, output_dim)
    return {"w0": w0, "b0": b0, "w1": w1, "b1": b1, "wout": wo, "bout": bo}


def reference_forward(x, params):
    """Plain-JAX reference mirroring the PyTorch forward."""
    h = jax.nn.relu(x @ params["w0"] + params["b0"][0])
    h = jax.nn.relu(h @ params["w1"] + params["b1"][0])
    out = h @ params["wout"] + params["bout"][0]
    return out, h


if __name__ == "__main__":
    key = jax.random.PRNGKey(0)
    kx, kx2, kp = jax.random.split(key, 3)

    input_dim, hidden_dim, output_dim = 16, 32, 4
    batch, seq = 2, 8                     # x: [batch, seq, input_dim]

    x = jax.random.normal(kx, (batch, seq, input_dim), jnp.float32)
    params = init_params(kp, input_dim, hidden_dim, output_dim)

    ref_out, ref_h = reference_forward(x.reshape(-1, input_dim), params)
    ref_out = ref_out.reshape(batch, seq, output_dim)
    ref_h = ref_h.reshape(batch, seq, hidden_dim)

    # Default path: bf16 MXU operands / storage, return_h=False (PyTorch default)
    out_bf = jax.block_until_ready(basic_decoder_forward(x, params))
    assert out_bf.shape == (batch, seq, output_dim)
    assert out_bf.dtype == x.dtype
    assert jnp.allclose(out_bf, ref_out, atol=5e-2, rtol=5e-2)

    # Default-precision path with the hidden layer returned
    out_bf2, h_bf = basic_decoder_forward(x, params, return_h=True)
    out_bf2 = jax.block_until_ready(out_bf2)
    h_bf = jax.block_until_ready(h_bf)
    assert h_bf.shape == (batch, seq, hidden_dim)
    assert jnp.allclose(out_bf2, ref_out, atol=5e-2, rtol=5e-2)
    assert jnp.allclose(h_bf, ref_h, atol=5e-2, rtol=5e-2)

    # Bit-accurate f32 path
    out_f32, h_f32 = basic_decoder_forward(
        x, params, return_h=True, act_dtype=jnp.float32)
    out_f32 = jax.block_until_ready(out_f32)
    h_f32 = jax.block_until_ready(h_f32)
    assert jnp.allclose(out_f32, ref_out, atol=1e-5, rtol=1e-5)
    assert jnp.allclose(h_f32, ref_h, atol=1e-5, rtol=1e-5)

    # Ragged N + multi-step grid (exercises padding + >=2 grid steps)
    xr = jax.random.normal(kx2, (2, 300, input_dim), jnp.float32)
    ref_out_r, _ = reference_forward(xr.reshape(-1, input_dim), params)
    ref_out_r = ref_out_r.reshape(2, 300, output_dim)
    out_r = jax.block_until_ready(
        basic_decoder_forward(xr, params, act_dtype=jnp.float32))
    assert out_r.shape == (2, 300, output_dim)
    assert jnp.allclose(out_r, ref_out_r, atol=1e-5, rtol=1e-5)

    print("KERNEL_OK")
</pallas_src>

<mosaic_0001>
module attributes {stable_mosaic.version = 11 : i64} {
  func.func @_mlp_kernel(%arg0: i32, %arg1: memref<16x128xbf16, #tpu.memory_space<vmem>>, %arg2: memref<128x256xbf16, #tpu.memory_space<vmem>>, %arg3: memref<1x256xf32, #tpu.memory_space<vmem>>, %arg4: memref<256x256xbf16, #tpu.memory_space<vmem>>, %arg5: memref<1x256xf32, #tpu.memory_space<vmem>>, %arg6: memref<256x32xbf16, #tpu.memory_space<vmem>>, %arg7: memref<1x32xf32, #tpu.memory_space<vmem>>, %arg8: memref<16x32xbf16, #tpu.memory_space<vmem>>) attributes {dimension_semantics = [#tpu.dimension_semantics<parallel>], iteration_bounds = array<i64: 1>, scalar_prefetch = 0 : i64, scratch_operands = 0 : i64, tpu.core_type = #tpu.core_type<tc>, window_params = [{transform_indices = @transform_0, window_bounds = array<i64: 16, 128>}, {pipeline_mode = #tpu.pipeline_mode<synchronous>, transform_indices = @transform_1, window_bounds = array<i64: 128, 256>}, {pipeline_mode = #tpu.pipeline_mode<synchronous>, transform_indices = @transform_2, window_bounds = array<i64: 1, 256>}, {pipeline_mode = #tpu.pipeline_mode<synchronous>, transform_indices = @transform_3, window_bounds = array<i64: 256, 256>}, {pipeline_mode = #tpu.pipeline_mode<synchronous>, transform_indices = @transform_4, window_bounds = array<i64: 1, 256>}, {pipeline_mode = #tpu.pipeline_mode<synchronous>, transform_indices = @transform_5, window_bounds = array<i64: 256, 32>}, {pipeline_mode = #tpu.pipeline_mode<synchronous>, transform_indices = @transform_6, window_bounds = array<i64: 1, 32>}, {transform_indices = @transform_7, window_bounds = array<i64: 16, 32>}]} {
    %c0 = arith.constant 0 : index
    %c0_0 = arith.constant 0 : index
    %0 = vector.load %arg1[%c0, %c0_0] : memref<16x128xbf16, #tpu.memory_space<vmem>>, vector<16x128xbf16>
    %c0_1 = arith.constant 0 : index
    %c0_2 = arith.constant 0 : index
    %1 = vector.load %arg2[%c0_1, %c0_2] : memref<128x256xbf16, #tpu.memory_space<vmem>>, vector<128x256xbf16>
    %cst = arith.constant dense<0.000000e+00> : vector<16x256xf32>
    %2 = tpu.matmul %0, %1, %cst {dimension_numbers = #tpu.dot_dimension_numbers<[1], [0], [0], [1], [0, 0, 1, 1], [], []>} : vector<16x128xbf16>, vector<128x256xbf16>, vector<16x256xf32> -> vector<16x256xf32>
    %c0_3 = arith.constant 0 : index
    %c0_4 = arith.constant 0 : index
    %3 = vector.load %arg3[%c0_3, %c0_4] : memref<1x256xf32, #tpu.memory_space<vmem>>, vector<1x256xf32>
    %4 = vector.broadcast %3 : vector<1x256xf32> to vector<16x256xf32>
    %5 = arith.addf %2, %4 : vector<16x256xf32>
    %cst_5 = arith.constant 0.000000e+00 : f32
    %6 = vector.broadcast %cst_5 : f32 to vector<16x256xf32>
    %7 = arith.maximumf %5, %6 : vector<16x256xf32>
    %8 = arith.truncf %7 : vector<16x256xf32> to vector<16x256xbf16>
    %c0_6 = arith.constant 0 : index
    %c0_7 = arith.constant 0 : index
    %9 = vector.load %arg4[%c0_6, %c0_7] : memref<256x256xbf16, #tpu.memory_space<vmem>>, vector<256x256xbf16>
    %cst_8 = arith.constant dense<0.000000e+00> : vector<16x256xf32>
    %10 = tpu.matmul %8, %9, %cst_8 {dimension_numbers = #tpu.dot_dimension_numbers<[1], [0], [0], [1], [0, 0, 1, 1], [], []>} : vector<16x256xbf16>, vector<256x256xbf16>, vector<16x256xf32> -> vector<16x256xf32>
    %c0_9 = arith.constant 0 : index
    %c0_10 = arith.constant 0 : index
    %11 = vector.load %arg5[%c0_9, %c0_10] : memref<1x256xf32, #tpu.memory_space<vmem>>, vector<1x256xf32>
    %12 = vector.broadcast %11 : vector<1x256xf32> to vector<16x256xf32>
    %13 = arith.addf %10, %12 : vector<16x256xf32>
    %cst_11 = arith.constant 0.000000e+00 : f32
    %14 = vector.broadcast %cst_11 : f32 to vector<16x256xf32>
    %15 = arith.maximumf %13, %14 : vector<16x256xf32>
    %16 = arith.truncf %15 : vector<16x256xf32> to vector<16x256xbf16>
    %c0_12 = arith.constant 0 : index
    %c0_13 = arith.constant 0 : index
    %17 = vector.load %arg6[%c0_12, %c0_13] : memref<256x32xbf16, #tpu.memory_space<vmem>>, vector<256x32xbf16>
    %cst_14 = arith.constant dense<0.000000e+00> : vector<16x32xf32>
    %18 = tpu.matmul %16, %17, %cst_14 {dimension_numbers = #tpu.dot_dimension_numbers<[1], [0], [0], [1], [0, 0, 1, 1], [], []>} : vector<16x256xbf16>, vector<256x32xbf16>, vector<16x32xf32> -> vector<16x32xf32>
    %c0_15 = arith.constant 0 : index
    %c0_16 = arith.constant 0 : index
    %19 = vector.load %arg7[%c0_15, %c0_16] : memref<1x32xf32, #tpu.memory_space<vmem>>, vector<1x32xf32>
    %20 = vector.broadcast %19 : vector<1x32xf32> to vector<16x32xf32>
    %21 = arith.addf %18, %20 : vector<16x32xf32>
    %22 = arith.truncf %21 : vector<16x32xf32> to vector<16x32xbf16>
    %c0_17 = arith.constant 0 : index
    %c0_18 = arith.constant 0 : index
    %23 = vector.load %arg8[%c0_17, %c0_18] : memref<16x32xbf16, #tpu.memory_space<vmem>>, vector<16x32xbf16>
    tpu.vector_store %arg8[%c0_17, %c0_18], %22 {strides = array<i32>} : memref<16x32xbf16, #tpu.memory_space<vmem>>, vector<16x32xbf16>,
    return
  }
  func.func @transform_0(%arg0: i32) -> (i32, i32) {
    %c0_i32 = arith.constant 0 : i32
    %c0_i32_0 = arith.constant 0 : i32
    return %arg0, %c0_i32 : i32, i32
  }
  func.func @transform_1(%arg0: i32) -> (i32, i32) {
    %c0_i32 = arith.constant 0 : i32
    %c0_i32_0 = arith.constant 0 : i32
    %c0_i32_1 = arith.constant 0 : i32
    return %c0_i32, %c0_i32_0 : i32, i32
  }
  func.func @transform_2(%arg0: i32) -> (i32, i32) {
    %c0_i32 = arith.constant 0 : i32
    %c0_i32_0 = arith.constant 0 : i32
    %c0_i32_1 = arith.constant 0 : i32
    return %c0_i32, %c0_i32_0 : i32, i32
  }
  func.func @transform_3(%arg0: i32) -> (i32, i32) {
    %c0_i32 = arith.constant 0 : i32
    %c0_i32_0 = arith.constant 0 : i32
    %c0_i32_1 = arith.constant 0 : i32
    return %c0_i32, %c0_i32_0 : i32, i32
  }
  func.func @transform_4(%arg0: i32) -> (i32, i32) {
    %c0_i32 = arith.constant 0 : i32
    %c0_i32_0 = arith.constant 0 : i32
    %c0_i32_1 = arith.constant 0 : i32
    return %c0_i32, %c0_i32_0 : i32, i32
  }
  func.func @transform_5(%arg0: i32) -> (i32, i32) {
    %c0_i32 = arith.constant 0 : i32
    %c0_i32_0 = arith.constant 0 : i32
    %c0_i32_1 = arith.constant 0 : i32
    return %c0_i32, %c0_i32_0 : i32, i32
  }
  func.func @transform_6(%arg0: i32) -> (i32, i32) {
    %c0_i32 = arith.constant 0 : i32
    %c0_i32_0 = arith.constant 0 : i32
    %c0_i32_1 = arith.constant 0 : i32
    return %c0_i32, %c0_i32_0 : i32, i32
  }
  func.func @transform_7(%arg0: i32) -> (i32, i32) {
    %c0_i32 = arith.constant 0 : i32
    %c0_i32_0 = arith.constant 0 : i32
    return %arg0, %c0_i32 : i32, i32
  }
}

</mosaic_0001>

<llo_original>
// kernel: basic_decoder_forward.1
$region0: #{basic_decoder_forward.1}
  #allocation0 [shape = 'u32[]', space=smem, size = 0x4, offset = 0x4, fixed_abs, tag = 'smem constant byte address 0x4 - core index']
  #allocation1 [shape = 'u32[144,128]{1,0:T(1,128)}', space=vmem, size = 0x12000, scoped, tag = 'internal scratch']
  %s0 = inlined_call_operand.vmem [shape: bf16[16,128], index: 0, kind: input, shape index: {}]
  %s1 = inlined_call_operand.vmem [shape: bf16[128,256], index: 1, kind: input, shape index: {}]
  %s2 = inlined_call_operand.vmem [shape: f32[1,256], index: 2, kind: input, shape index: {}]
  %s3 = inlined_call_operand.vmem [shape: bf16[256,256], index: 3, kind: input, shape index: {}]
  %s4 = inlined_call_operand.vmem [shape: f32[1,256], index: 4, kind: input, shape index: {}]
  %s5 = inlined_call_operand.vmem [shape: bf16[256,32], index: 5, kind: input, shape index: {}]
  %s6 = inlined_call_operand.vmem [shape: f32[1,32], index: 6, kind: input, shape index: {}]
  %s7 = inlined_call_operand.vmem [shape: bf16[16,32], index: 7, kind: output, shape index: {}]
  %s8 = sld [smem:[#allocation0]]
  $region38: #{basic_decoder_forward.1} parent=0
    _
  %s10 = ssub.s32 1, %s8
  %s11 = scalar_select 0, %s10, %s8
  // Predicated region
  $region2: #{basic_decoder_forward.1} parent=0 // pred_check
    _
  $region3: #{basic_decoder_forward.1} parent=0 // pred_check_branch
    %13 = sbr.rel (0) target = $region5
  $region4: #{basic_decoder_forward.1} parent=0 // pred_region
    _
  $region5: #{basic_decoder_forward.1} parent=0 // pred_fallthru
    _
  // Predicated region
  $region6: #{basic_decoder_forward.1} parent=0 // pred_check
    _
  $region7: #{basic_decoder_forward.1} parent=0 // pred_check_branch
    %15 = sbr.rel (0) target = $region9
  $region8: #{basic_decoder_forward.1} parent=0 // pred_region
    _
  $region9: #{basic_decoder_forward.1} parent=0 // pred_fallthru
    _
  // Predicated region
  $region10: #{basic_decoder_forward.1} parent=0 // pred_check
    _
  $region11: #{basic_decoder_forward.1} parent=0 // pred_check_branch
    %17 = sbr.rel (0) target = $region13
  $region12: #{basic_decoder_forward.1} parent=0 // pred_region
    _
  $region13: #{basic_decoder_forward.1} parent=0 // pred_fallthru
    _
  // Predicated region
  $region14: #{basic_decoder_forward.1} parent=0 // pred_check
    _
  $region15: #{basic_decoder_forward.1} parent=0 // pred_check_branch
    %19 = sbr.rel (0) target = $region17
  $region16: #{basic_decoder_forward.1} parent=0 // pred_region
    _
  $region17: #{basic_decoder_forward.1} parent=0 // pred_fallthru
    _
  // Predicated region
  $region18: #{basic_decoder_forward.1} parent=0 // pred_check
    _
  $region19: #{basic_decoder_forward.1} parent=0 // pred_check_branch
    %21 = sbr.rel (0) target = $region21
  $region20: #{basic_decoder_forward.1} parent=0 // pred_region
    _
  $region21: #{basic_decoder_forward.1} parent=0 // pred_fallthru
    _
  // Predicated region
  $region22: #{basic_decoder_forward.1} parent=0 // pred_check
    _
  $region23: #{basic_decoder_forward.1} parent=0 // pred_check_branch
    %23 = sbr.rel (0) target = $region25
  $region24: #{basic_decoder_forward.1} parent=0 // pred_region
    _
  $region25: #{basic_decoder_forward.1} parent=0 // pred_fallthru
    _
  // Predicated region
  $region26: #{basic_decoder_forward.1} parent=0 // pred_check
    _
  $region27: #{basic_decoder_forward.1} parent=0 // pred_check_branch
    %25 = sbr.rel (0) target = $region29
  $region28: #{basic_decoder_forward.1} parent=0 // pred_region
    _
  $region29: #{basic_decoder_forward.1} parent=0 // pred_fallthru
    _
  %v27 = vld [vmem:[%s0] sm:$0xf]
  %v28 = vld [vmem:[%s0 + $0x4] sm:$0xf]
  %v29 = vld [vmem:[%s1] sm:$0xff]
  %v30 = vld [vmem:[%s1 + $0x8] sm:$0xff]
  %v31 = vld [vmem:[%s1 + $0x10] sm:$0xff]
  %v32 = vld [vmem:[%s1 + $0x18] sm:$0xff]
  %v33 = vld [vmem:[%s1 + $0x20] sm:$0xff]
  %v34 = vld [vmem:[%s1 + $0x28] sm:$0xff]
  %v35 = vld [vmem:[%s1 + $0x30] sm:$0xff]
  %v36 = vld [vmem:[%s1 + $0x38] sm:$0xff]
  %v37 = vld [vmem:[%s1 + $0x40] sm:$0xff]
  %v38 = vld [vmem:[%s1 + $0x48] sm:$0xff]
  %v39 = vld [vmem:[%s1 + $0x50] sm:$0xff]
  %v40 = vld [vmem:[%s1 + $0x58] sm:$0xff]
  %v41 = vld [vmem:[%s1 + $0x60] sm:$0xff]
  %v42 = vld [vmem:[%s1 + $0x68] sm:$0xff]
  %v43 = vld [vmem:[%s1 + $0x70] sm:$0xff]
  %v44 = vld [vmem:[%s1 + $0x78] sm:$0xff]
  %v45 = vld [vmem:[%s2] sm:$0x3]
  %v47 = vlaneseq
  %v48 = vshrl.u32 %v47, 7
  %v49 = vsub.s32 0, %v48
  %v50 = vrot.slane %v45, %v49
  %v51 = vlaneseq
  %v52 = vshrl.u32 %v51, 7
  %v53 = vsub.s32 1, %v52
  %v54 = vrot.slane %v45, %v53
  %v59 = vunpack.c.l.b16 %v27
  %v60 = vunpack.c.l.b16 %v28
  %v61 = vpack.c.b16 %v60, %v59
  %v79 = vunpack.c.l.b16 %v29
  %v80 = vunpack.c.h.b16 %v29
  %v81 = vunpack.c.l.b16 %v30
  %v82 = vunpack.c.h.b16 %v30
  %v83 = vunpack.c.l.b16 %v31
  %v84 = vunpack.c.h.b16 %v31
  %v85 = vunpack.c.l.b16 %v32
  %v86 = vunpack.c.h.b16 %v32
  %v87 = vunpack.c.l.b16 %v33
  %v88 = vunpack.c.h.b16 %v33
  %v89 = vunpack.c.l.b16 %v34
  %v90 = vunpack.c.h.b16 %v34
  %v91 = vunpack.c.l.b16 %v35
  %v92 = vunpack.c.h.b16 %v35
  %v93 = vunpack.c.l.b16 %v36
  %v94 = vunpack.c.h.b16 %v36
  %v95 = vunpack.c.l.b16 %v37
  %v96 = vunpack.c.h.b16 %v37
  %v97 = vunpack.c.l.b16 %v38
  %v98 = vunpack.c.h.b16 %v38
  %v99 = vunpack.c.l.b16 %v39
  %v100 = vunpack.c.h.b16 %v39
  %v101 = vunpack.c.l.b16 %v40
  %v102 = vunpack.c.h.b16 %v40
  %v103 = vunpack.c.l.b16 %v41
  %v104 = vunpack.c.h.b16 %v41
  %v105 = vunpack.c.l.b16 %v42
  %v106 = vunpack.c.h.b16 %v42
  %v107 = vunpack.c.l.b16 %v43
  %v108 = vunpack.c.h.b16 %v43
  %v109 = vunpack.c.l.b16 %v44
  %v110 = vunpack.c.h.b16 %v44
  %v111 = vpack.c.b16 %v81, %v79
  %v112 = vpack.c.b16 %v82, %v80
  %v113 = vpack.c.b16 %v85, %v83
  %v114 = vpack.c.b16 %v86, %v84
  %v115 = vpack.c.b16 %v89, %v87
  %v116 = vpack.c.b16 %v90, %v88
  %v117 = vpack.c.b16 %v93, %v91
  %v118 = vpack.c.b16 %v94, %v92
  %v119 = vpack.c.b16 %v97, %v95
  %v120 = vpack.c.b16 %v98, %v96
  %v121 = vpack.c.b16 %v101, %v99
  %v122 = vpack.c.b16 %v102, %v100
  %v123 = vpack.c.b16 %v105, %v103
  %v124 = vpack.c.b16 %v106, %v104
  %v125 = vpack.c.b16 %v109, %v107
  %v126 = vpack.c.b16 %v110, %v108
  %143 = vmatprep.subr.bf16.mxu0 %v126
  %144 = vmatpush1.bf16.msra.mxu0 %v125
  %145 = vmatprep.subr.bf16.mxu0 %v124
  %146 = vmatpush1.bf16.msra.mxu0 %v123
  %147 = vmatprep.subr.bf16.mxu0 %v122
  %148 = vmatpush1.bf16.msra.mxu0 %v121
  %149 = vmatprep.subr.bf16.mxu0 %v120
  %150 = vmatpush1.bf16.msra.mxu0 %v119
  %151 = vmatprep.subr.bf16.mxu0 %v118
  %152 = vmatpush1.bf16.msra.mxu0 %v117
  %153 = vmatprep.subr.bf16.mxu0 %v116
  %154 = vmatpush1.bf16.msra.mxu0 %v115
  %155 = vmatprep.subr.bf16.mxu0 %v114
  %156 = vmatpush1.bf16.msra.mxu0 %v113
  %157 = vmatprep.subr.bf16.mxu0 %v112
  %158 = vmatpush1.bf16.msra.mxu0 %v111
  %159 = vmatprep.subr.bf16.mxu0 0
  %160 = vmatpush2.bf16.msra.mxu0 0
  %161 = vmatprep.subr.bf16.mxu0 0
  %162 = vmatpush2.bf16.msra.mxu0 0
  %163 = vmatprep.subr.bf16.mxu0 0
  %164 = vmatpush2.bf16.msra.mxu0 0
  %165 = vmatprep.subr.bf16.mxu0 0
  %166 = vmatpush2.bf16.msra.mxu0 0
  %167 = vmatprep.subr.bf16.mxu0 0
  %168 = vmatpush2.bf16.msra.mxu0 0
  %169 = vmatprep.subr.bf16.mxu0 0
  %170 = vmatpush2.bf16.msra.mxu0 0
  %171 = vmatprep.subr.bf16.mxu0 0
  %172 = vmatpush2.bf16.msra.mxu0 0
  %173 = vmatprep.subr.bf16.mxu0 0
  %174 = vmatpush2.bf16.msra.mxu0 0
  %175 = vmatprep.mubr.bf16.mxu0 0
  %176 = vmatmul.mubr.bf16.gmra.mxu0 %v61
  %v177 = vpop.f32.mrf.mxu0
  %v178 = vadd.f32 %v50, %v177
  %v179 = vpop.f32.mrf.mxu0
  %v180 = vadd.f32 %v54, %v179
  %v181 = vpop.f32.mrf.mxu0
  %v182 = vadd.f32 %v50, %v181
  %v183 = vpop.f32.mrf.mxu0
  %v184 = vadd.f32 %v54, %v183
  %185 = vdwg.mxu0
  %v186 = vmax.f32 %v178, 0.0
  %v187 = vmax.f32 %v180, 0.0
  %v188 = vmax.f32 %v182, 0.0
  %v189 = vmax.f32 %v184, 0.0
  %v190 = vpack.c.bf16 %v188, %v186
  %v191 = vpack.c.bf16 %v189, %v187
  %v192 = vld [vmem:[%s3] sm:$0xff]
  %v193 = vld [vmem:[%s3 + $0x8] sm:$0xff]
  %v194 = vld [vmem:[%s3 + $0x10] sm:$0xff]
  %v195 = vld [vmem:[%s3 + $0x18] sm:$0xff]
  %v196 = vld [vmem:[%s3 + $0x20] sm:$0xff]
  %v197 = vld [vmem:[%s3 + $0x28] sm:$0xff]
  %v198 = vld [vmem:[%s3 + $0x30] sm:$0xff]
  %v199 = vld [vmem:[%s3 + $0x38] sm:$0xff]
  %v200 = vld [vmem:[%s3 + $0x40] sm:$0xff]
  %v201 = vld [vmem:[%s3 + $0x48] sm:$0xff]
  %v202 = vld [vmem:[%s3 + $0x50] sm:$0xff]
  %v203 = vld [vmem:[%s3 + $0x58] sm:$0xff]
  %v204 = vld [vmem:[%s3 + $0x60] sm:$0xff]
  %v205 = vld [vmem:[%s3 + $0x68] sm:$0xff]
  %v206 = vld [vmem:[%s3 + $0x70] sm:$0xff]
  %v207 = vld [vmem:[%s3 + $0x78] sm:$0xff]
  %v208 = vld [vmem:[%s3 + $0x80] sm:$0xff]
  %v209 = vld [vmem:[%s3 + $0x88] sm:$0xff]
  %v210 = vld [vmem:[%s3 + $0x90] sm:$0xff]
  %v211 = vld [vmem:[%s3 + $0x98] sm:$0xff]
  %v212 = vld [vmem:[%s3 + $0xa0] sm:$0xff]
  %v213 = vld [vmem:[%s3 + $0xa8] sm:$0xff]
  %v214 = vld [vmem:[%s3 + $0xb0] sm:$0xff]
  %v215 = vld [vmem:[%s3 + $0xb8] sm:$0xff]
  %v216 = vld [vmem:[%s3 + $0xc0] sm:$0xff]
  %v217 = vld [vmem:[%s3 + $0xc8] sm:$0xff]
  %v218 = vld [vmem:[%s3 + $0xd0] sm:$0xff]
  %v219 = vld [vmem:[%s3 + $0xd8] sm:$0xff]
  %v220 = vld [vmem:[%s3 + $0xe0] sm:$0xff]
  %v221 = vld [vmem:[%s3 + $0xe8] sm:$0xff]
  %v222 = vld [vmem:[%s3 + $0xf0] sm:$0xff]
  %v223 = vld [vmem:[%s3 + $0xf8] sm:$0xff]
  %v224 = vld [vmem:[%s4] sm:$0x3]
  %v226 = vlaneseq
  %v227 = vshrl.u32 %v226, 7
  %v228 = vsub.s32 0, %v227
  %v229 = vrot.slane %v224, %v228
  %v230 = vlaneseq
  %v231 = vshrl.u32 %v230, 7
  %v232 = vsub.s32 1, %v231
  %v233 = vrot.slane %v224, %v232
  %v268 = vunpack.c.l.b16 %v192
  %v269 = vunpack.c.h.b16 %v192
  %v270 = vunpack.c.l.b16 %v193
  %v271 = vunpack.c.h.b16 %v193
  %v272 = vunpack.c.l.b16 %v194
  %v273 = vunpack.c.h.b16 %v194
  %v274 = vunpack.c.l.b16 %v195
  %v275 = vunpack.c.h.b16 %v195
  %v276 = vunpack.c.l.b16 %v196
  %v277 = vunpack.c.h.b16 %v196
  %v278 = vunpack.c.l.b16 %v197
  %v279 = vunpack.c.h.b16 %v197
  %v280 = vunpack.c.l.b16 %v198
  %v281 = vunpack.c.h.b16 %v198
  %v282 = vunpack.c.l.b16 %v199
  %v283 = vunpack.c.h.b16 %v199
  %v284 = vunpack.c.l.b16 %v200
  %v285 = vunpack.c.h.b16 %v200
  %v286 = vunpack.c.l.b16 %v201
  %v287 = vunpack.c.h.b16 %v201
  %v288 = vunpack.c.l.b16 %v202
  %v289 = vunpack.c.h.b16 %v202
  %v290 = vunpack.c.l.b16 %v203
  %v291 = vunpack.c.h.b16 %v203
  %v292 = vunpack.c.l.b16 %v204
  %v293 = vunpack.c.h.b16 %v204
  %v294 = vunpack.c.l.b16 %v205
  %v295 = vunpack.c.h.b16 %v205
  %v296 = vunpack.c.l.b16 %v206
  %v297 = vunpack.c.h.b16 %v206
  %v298 = vunpack.c.l.b16 %v207
  %v299 = vunpack.c.h.b16 %v207
  %v300 = vunpack.c.l.b16 %v208
  %v301 = vunpack.c.h.b16 %v208
  %v302 = vunpack.c.l.b16 %v209
  %v303 = vunpack.c.h.b16 %v209
  %v304 = vunpack.c.l.b16 %v210
  %v305 = vunpack.c.h.b16 %v210
  %v306 = vunpack.c.l.b16 %v211
  %v307 = vunpack.c.h.b16 %v211
  %v308 = vunpack.c.l.b16 %v212
  %v309 = vunpack.c.h.b16 %v212
  %v310 = vunpack.c.l.b16 %v213
  %v311 = vunpack.c.h.b16 %v213
  %v312 = vunpack.c.l.b16 %v214
  %v313 = vunpack.c.h.b16 %v214
  %v314 = vunpack.c.l.b16 %v215
  %v315 = vunpack.c.h.b16 %v215
  %v316 = vunpack.c.l.b16 %v216
  %v317 = vunpack.c.h.b16 %v216
  %v318 = vunpack.c.l.b16 %v217
  %v319 = vunpack.c.h.b16 %v217
  %v320 = vunpack.c.l.b16 %v218
  %v321 = vunpack.c.h.b16 %v218
  %v322 = vunpack.c.l.b16 %v219
  %v323 = vunpack.c.h.b16 %v219
  %v324 = vunpack.c.l.b16 %v220
  %v325 = vunpack.c.h.b16 %v220
  %v326 = vunpack.c.l.b16 %v221
  %v327 = vunpack.c.h.b16 %v221
  %v328 = vunpack.c.l.b16 %v222
  %v329 = vunpack.c.h.b16 %v222
  %v330 = vunpack.c.l.b16 %v223
  %v331 = vunpack.c.h.b16 %v223
  %v332 = vpack.c.b16 %v270, %v268
  %v333 = vpack.c.b16 %v271, %v269
  %v334 = vpack.c.b16 %v274, %v272
  %v335 = vpack.c.b16 %v275, %v273
  %v336 = vpack.c.b16 %v278, %v276
  %v337 = vpack.c.b16 %v279, %v277
  %v338 = vpack.c.b16 %v282, %v280
  %v339 = vpack.c.b16 %v283, %v281
  %v340 = vpack.c.b16 %v286, %v284
  %v341 = vpack.c.b16 %v287, %v285
  %v342 = vpack.c.b16 %v290, %v288
  %v343 = vpack.c.b16 %v291, %v289
  %v344 = vpack.c.b16 %v294, %v292
  %v345 = vpack.c.b16 %v295, %v293
  %v346 = vpack.c.b16 %v298, %v296
  %v347 = vpack.c.b16 %v299, %v297
  %v348 = vpack.c.b16 %v302, %v300
  %v349 = vpack.c.b16 %v303, %v301
  %v350 = vpack.c.b16 %v306, %v304
  %v351 = vpack.c.b16 %v307, %v305
  %v352 = vpack.c.b16 %v310, %v308
  %v353 = vpack.c.b16 %v311, %v309
  %v354 = vpack.c.b16 %v314, %v312
  %v355 = vpack.c.b16 %v315, %v313
  %v356 = vpack.c.b16 %v318, %v316
  %v357 = vpack.c.b16 %v319, %v317
  %v358 = vpack.c.b16 %v322, %v320
  %v359 = vpack.c.b16 %v323, %v321
  %v360 = vpack.c.b16 %v326, %v324
  %v361 = vpack.c.b16 %v327, %v325
  %v362 = vpack.c.b16 %v330, %v328
  %v363 = vpack.c.b16 %v331, %v329
  %396 = vmatprep.subr.bf16.mxu0 %v347
  %397 = vmatpush1.bf16.msra.mxu0 %v346
  %398 = vmatprep.subr.bf16.mxu0 %v345
  %399 = vmatpush1.bf16.msra.mxu0 %v344
  %400 = vmatprep.subr.bf16.mxu0 %v343
  %401 = vmatpush1.bf16.msra.mxu0 %v342
  %402 = vmatprep.subr.bf16.mxu0 %v341
  %403 = vmatpush1.bf16.msra.mxu0 %v340
  %404 = vmatprep.subr.bf16.mxu0 %v339
  %405 = vmatpush1.bf16.msra.mxu0 %v338
  %406 = vmatprep.subr.bf16.mxu0 %v337
  %407 = vmatpush1.bf16.msra.mxu0 %v336
  %408 = vmatprep.subr.bf16.mxu0 %v335
  %409 = vmatpush1.bf16.msra.mxu0 %v334
  %410 = vmatprep.subr.bf16.mxu0 %v333
  %411 = vmatpush1.bf16.msra.mxu0 %v332
  %412 = vmatprep.subr.bf16.mxu0 %v363
  %413 = vmatpush2.bf16.msra.mxu0 %v362
  %414 = vmatprep.subr.bf16.mxu0 %v361
  %415 = vmatpush2.bf16.msra.mxu0 %v360
  %416 = vmatprep.subr.bf16.mxu0 %v359
  %417 = vmatpush2.bf16.msra.mxu0 %v358
  %418 = vmatprep.subr.bf16.mxu0 %v357
  %419 = vmatpush2.bf16.msra.mxu0 %v356
  %420 = vmatprep.subr.bf16.mxu0 %v355
  %421 = vmatpush2.bf16.msra.mxu0 %v354
  %422 = vmatprep.subr.bf16.mxu0 %v353
  %423 = vmatpush2.bf16.msra.mxu0 %v352
  %424 = vmatprep.subr.bf16.mxu0 %v351
  %425 = vmatpush2.bf16.msra.mxu0 %v350
  %426 = vmatprep.subr.bf16.mxu0 %v349
  %427 = vmatpush2.bf16.msra.mxu0 %v348
  %428 = vmatprep.mubr.bf16.mxu0 %v191
  %429 = vmatmul.mubr.bf16.gmra.mxu0 %v190
  %v430 = vpop.f32.mrf.mxu0
  %v431 = vadd.f32 %v229, %v430
  %v432 = vpop.f32.mrf.mxu0
  %v433 = vadd.f32 %v233, %v432
  %v434 = vpop.f32.mrf.mxu0
  %v435 = vadd.f32 %v229, %v434
  %v436 = vpop.f32.mrf.mxu0
  %v437 = vadd.f32 %v233, %v436
  %438 = vdwg.mxu0
  %v439 = vmax.f32 %v431, 0.0
  %v440 = vmax.f32 %v433, 0.0
  %v441 = vmax.f32 %v435, 0.0
  %v442 = vmax.f32 %v437, 0.0
  %v443 = vpack.c.bf16 %v441, %v439
  %v444 = vpack.c.bf16 %v442, %v440
  %v445 = vld [vmem:[%s5] sm:$0xf]
  %v446 = vld [vmem:[%s5 + $0x4] sm:$0xf]
  %v447 = vld [vmem:[%s5 + $0x8] sm:$0xf]
  %v448 = vld [vmem:[%s5 + $0xc] sm:$0xf]
  %v449 = vld [vmem:[%s5 + $0x10] sm:$0xf]
  %v450 = vld [vmem:[%s5 + $0x14] sm:$0xf]
  %v451 = vld [vmem:[%s5 + $0x18] sm:$0xf]
  %v452 = vld [vmem:[%s5 + $0x1c] sm:$0xf]
  %v453 = vld [vmem:[%s5 + $0x20] sm:$0xf]
  %v454 = vld [vmem:[%s5 + $0x24] sm:$0xf]
  %v455 = vld [vmem:[%s5 + $0x28] sm:$0xf]
  %v456 = vld [vmem:[%s5 + $0x2c] sm:$0xf]
  %v457 = vld [vmem:[%s5 + $0x30] sm:$0xf]
  %v458 = vld [vmem:[%s5 + $0x34] sm:$0xf]
  %v459 = vld [vmem:[%s5 + $0x38] sm:$0xf]
  %v460 = vld [vmem:[%s5 + $0x3c] sm:$0xf]
  %v461 = vld [vmem:[%s5 + $0x40] sm:$0xf]
  %v462 = vld [vmem:[%s5 + $0x44] sm:$0xf]
  %v463 = vld [vmem:[%s5 + $0x48] sm:$0xf]
  %v464 = vld [vmem:[%s5 + $0x4c] sm:$0xf]
  %v465 = vld [vmem:[%s5 + $0x50] sm:$0xf]
  %v466 = vld [vmem:[%s5 + $0x54] sm:$0xf]
  %v467 = vld [vmem:[%s5 + $0x58] sm:$0xf]
  %v468 = vld [vmem:[%s5 + $0x5c] sm:$0xf]
  %v469 = vld [vmem:[%s5 + $0x60] sm:$0xf]
  %v470 = vld [vmem:[%s5 + $0x64] sm:$0xf]
  %v471 = vld [vmem:[%s5 + $0x68] sm:$0xf]
  %v472 = vld [vmem:[%s5 + $0x6c] sm:$0xf]
  %v473 = vld [vmem:[%s5 + $0x70] sm:$0xf]
  %v474 = vld [vmem:[%s5 + $0x74] sm:$0xf]
  %v475 = vld [vmem:[%s5 + $0x78] sm:$0xf]
  %v476 = vld [vmem:[%s5 + $0x7c] sm:$0xf]
  %v477 = vld [vmem:[%s6] sm:$0x1]
  %v479 = vlaneseq
  %v480 = vshrl.u32 %v479, 7
  %v481 = vsub.s32 0, %v480
  %v482 = vrot.slane %v477, %v481
  %v516 = vunpack.c.l.b16 %v445
  %v517 = vunpack.c.l.b16 %v446
  %v518 = vunpack.c.l.b16 %v447
  %v519 = vunpack.c.l.b16 %v448
  %v520 = vunpack.c.l.b16 %v449
  %v521 = vunpack.c.l.b16 %v450
  %v522 = vunpack.c.l.b16 %v451
  %v523 = vunpack.c.l.b16 %v452
  %v524 = vunpack.c.l.b16 %v453
  %v525 = vunpack.c.l.b16 %v454
  %v526 = vunpack.c.l.b16 %v455
  %v527 = vunpack.c.l.b16 %v456
  %v528 = vunpack.c.l.b16 %v457
  %v529 = vunpack.c.l.b16 %v458
  %v530 = vunpack.c.l.b16 %v459
  %v531 = vunpack.c.l.b16 %v460
  %v532 = vunpack.c.l.b16 %v461
  %v533 = vunpack.c.l.b16 %v462
  %v534 = vunpack.c.l.b16 %v463
  %v535 = vunpack.c.l.b16 %v464
  %v536 = vunpack.c.l.b16 %v465
  %v537 = vunpack.c.l.b16 %v466
  %v538 = vunpack.c.l.b16 %v467
  %v539 = vunpack.c.l.b16 %v468
  %v540 = vunpack.c.l.b16 %v469
  %v541 = vunpack.c.l.b16 %v470
  %v542 = vunpack.c.l.b16 %v471
  %v543 = vunpack.c.l.b16 %v472
  %v544 = vunpack.c.l.b16 %v473
  %v545 = vunpack.c.l.b16 %v474
  %v546 = vunpack.c.l.b16 %v475
  %v547 = vunpack.c.l.b16 %v476
  %v548 = vpack.c.b16 %v517, %v516
  %v549 = vpack.c.b16 %v519, %v518
  %v550 = vpack.c.b16 %v521, %v520
  %v551 = vpack.c.b16 %v523, %v522
  %v552 = vpack.c.b16 %v525, %v524
  %v553 = vpack.c.b16 %v527, %v526
  %v554 = vpack.c.b16 %v529, %v528
  %v555 = vpack.c.b16 %v531, %v530
  %v556 = vpack.c.b16 %v533, %v532
  %v557 = vpack.c.b16 %v535, %v534
  %v558 = vpack.c.b16 %v537, %v536
  %v559 = vpack.c.b16 %v539, %v538
  %v560 = vpack.c.b16 %v541, %v540
  %v561 = vpack.c.b16 %v543, %v542
  %v562 = vpack.c.b16 %v545, %v544
  %v563 = vpack.c.b16 %v547, %v546
  %580 = vmatprep.subr.bf16.mxu0 0
  %581 = vmatpush1.bf16.msra.mxu0 %v555
  %582 = vmatprep.subr.bf16.mxu0 0
  %583 = vmatpush1.bf16.msra.mxu0 %v554
  %584 = vmatprep.subr.bf16.mxu0 0
  %585 = vmatpush1.bf16.msra.mxu0 %v553
  %586 = vmatprep.subr.bf16.mxu0 0
  %587 = vmatpush1.bf16.msra.mxu0 %v552
  %588 = vmatprep.subr.bf16.mxu0 0
  %589 = vmatpush1.bf16.msra.mxu0 %v551
  %590 = vmatprep.subr.bf16.mxu0 0
  %591 = vmatpush1.bf16.msra.mxu0 %v550
  %592 = vmatprep.subr.bf16.mxu0 0
  %593 = vmatpush1.bf16.msra.mxu0 %v549
  %594 = vmatprep.subr.bf16.mxu0 0
  %595 = vmatpush1.bf16.msra.mxu0 %v548
  %596 = vmatprep.subr.bf16.mxu0 0
  %597 = vmatpush2.bf16.msra.mxu0 %v563
  %598 = vmatprep.subr.bf16.mxu0 0
  %599 = vmatpush2.bf16.msra.mxu0 %v562
  %600 = vmatprep.subr.bf16.mxu0 0
  %601 = vmatpush2.bf16.msra.mxu0 %v561
  %602 = vmatprep.subr.bf16.mxu0 0
  %603 = vmatpush2.bf16.msra.mxu0 %v560
  %604 = vmatprep.subr.bf16.mxu0 0
  %605 = vmatpush2.bf16.msra.mxu0 %v559
  %606 = vmatprep.subr.bf16.mxu0 0
  %607 = vmatpush2.bf16.msra.mxu0 %v558
  %608 = vmatprep.subr.bf16.mxu0 0
  %609 = vmatpush2.bf16.msra.mxu0 %v557
  %610 = vmatprep.subr.bf16.mxu0 0
  %611 = vmatpush2.bf16.msra.mxu0 %v556
  %612 = vmatprep.mubr.bf16.mxu0 %v444
  %613 = vmatmul.mubr.bf16.gmra.mxu0 %v443
  %v614 = vpop.f32.mrf.mxu0
  %v615 = vadd.f32 %v482, %v614
  %v616 = vpop.f32.mrf.mxu0
  %v617 = vpop.f32.mrf.mxu0
  %v618 = vadd.f32 %v482, %v617
  %v619 = vpop.f32.mrf.mxu0
  %620 = vdwg.mxu0
  %v621 = vpack.c.bf16 %v618, %v615
  %v623 = vunpack.c.l.b16 %v621
  %v624 = vunpack.c.h.b16 %v621
  %v625 = vpack.c.b16 %v623, %v623
  %v626 = vpack.c.b16 %v624, %v624
  %vm629 = vcmask 257024
  %630 = vst.msk [vmem:[%s7] sm:$0xf] %vm629, %v625
  %631 = vst.msk [vmem:[%s7 + $0x4] sm:$0xf] %vm629, %v626
  // Predicated region
  $region30: #{basic_decoder_forward.1} parent=0 // pred_check
    _
  $region31: #{basic_decoder_forward.1} parent=0 // pred_check_branch
    %633 = sbr.rel (0) target = $region33
  $region32: #{basic_decoder_forward.1} parent=0 // pred_region
    _
  $region33: #{basic_decoder_forward.1} parent=0 // pred_fallthru
    _
  // Predicated region
  $region34: #{basic_decoder_forward.1} parent=0 // pred_check
    _
  $region35: #{basic_decoder_forward.1} parent=0 // pred_check_branch
    %635 = sbr.rel (0) target = $region37
  $region36: #{basic_decoder_forward.1} parent=0 // pred_region
    _
  $region37: #{basic_decoder_forward.1} parent=0 // pred_fallthru
    _

</llo_original>
